<compile_context>
chip_gen: v7x
topology: tpu7x:2x2x1
jax: 0.10.0
libtpu: 0.0.40
codegen_flags: <defaults>
</compile_context>

<pallas_src>
import jax
import jax.numpy as jnp
from jax.experimental import pallas as pl
from jax.experimental.pallas import tpu as pltpu

_BLOCK_BYTES = 4 * 1024 * 1024   # ~4 MiB per buffer (safe on v5e/v6e/v7x)
_LANE_CHOICES = (512, 256, 128)  # lane-dense last dims (multiples of 128)


def _cdiv(a, b):
    return -(-a // b)


def _round_up(a, b):
    return _cdiv(a, b) * b


def _dispact_kernel(x_ref, o_ref):
    # Upcast to f32 for the transcendental math regardless of I/O dtype.
    x = x_ref[...].astype(jnp.float32)
    # softplus(x) = log(1 + exp(x)); stable form: max(x, 0) + log1p(exp(-|x|))
    sp = jnp.maximum(x, 0.0) + jnp.log1p(jnp.exp(-jnp.abs(x)))
    o_ref[...] = jnp.clip(sp, 1e-4, 1e4).astype(o_ref.dtype)


def _run_2d(x2d):
    """Run the elementwise kernel over a lane-dense [rows, lanes] slab."""
    rows, lanes = x2d.shape
    itemsize = jnp.dtype(x2d.dtype).itemsize
    # Sublane alignment for packed dtypes: 8 (f32) / 16 (bf16) / 32 (int8/fp8).
    sub_align = max(8, (8 * 4) // itemsize)

    # dtype-aware block height targeting ~_BLOCK_BYTES per buffer.
    target = max(sub_align, _BLOCK_BYTES // (lanes * itemsize))
    target = (target // sub_align) * sub_align

    if rows <= target:
        if rows >= 2 * sub_align:
            # Split a single-block candidate into >=2 grid steps so both
            # TensorCores on v7x get work.
            block_rows = _round_up(_cdiv(rows, 2), sub_align)
        else:
            block_rows = rows  # block == full dim -> always a legal block
    else:
        block_rows = target

    grid = (_cdiv(rows, block_rows),)  # partial final block is masked

    return pl.pallas_call(
        _dispact_kernel,
        out_shape=jax.ShapeDtypeStruct((rows, lanes), x2d.dtype),
        grid=grid,
        in_specs=[pl.BlockSpec((block_rows, lanes), lambda i: (i, 0))],
        out_specs=pl.BlockSpec((block_rows, lanes), lambda i: (i, 0)),
        compiler_params=pltpu.CompilerParams(
            dimension_semantics=("parallel",),
            # Double-buffered in+out at ~4 MiB/buffer = 16 MiB; 32 MiB leaves
            # headroom on every generation (v7x scoped VMEM is 32 MiB).
            vmem_limit_bytes=32 * 1024 * 1024,
        ),
    )(x2d)


def disp_act(x):
    """Applies clamp(softplus(x), 1e-4, 1e4) elementwise. Any shape/float dtype."""
    orig_shape = x.shape
    n = x.size
    if n == 0:
        return x

    # Fast path: widest lane-dense last dim that divides n exactly -> both
    # reshapes are metadata-only; no pad, no slice, zero extra HBM passes.
    for lanes in _LANE_CHOICES:
        if n % lanes == 0:
            out2d = _run_2d(x.reshape(n // lanes, lanes))
            return out2d.reshape(orig_shape)

    # Fallback (n not a multiple of 128): pad the flat vector up to a whole
    # lane row (< 128 elements of actual padding processed by the kernel).
    # TODO(synk): a manual-DMA kernel could stream the bulk once and handle the
    # ragged tail in-kernel, avoiding the pad/slice HBM passes entirely.
    lanes = _LANE_CHOICES[-1]
    rows = _cdiv(n, lanes)
    xf = x.reshape(-1)
    xf = jnp.pad(xf, (0, rows * lanes - n))
    out2d = _run_2d(xf.reshape(rows, lanes))
    return out2d.reshape(-1)[:n].reshape(orig_shape)


if __name__ == "__main__":
    key = jax.random.PRNGKey(0)
    x = jax.random.normal(key, (2, 4, 16, 16), dtype=jnp.float32) * 5.0

    out = disp_act(x)
    jax.block_until_ready(out)

    ref = jnp.clip(jax.nn.softplus(x), 1e-4, 1e4)
    assert out.shape == x.shape
    assert out.dtype == x.dtype
    assert jnp.allclose(out, ref, atol=1e-5, rtol=1e-5)

    k1, k2, k3 = jax.random.split(jax.random.PRNGKey(1), 3)

    # Multi-block path with a masked partial final block (rows=20, block=16).
    x_big = jax.random.normal(k1, (20, 512), dtype=jnp.float32) * 4.0
    out_big = disp_act(x_big)
    jax.block_until_ready(out_big)
    assert jnp.allclose(out_big, jnp.clip(jax.nn.softplus(x_big), 1e-4, 1e4),
                        atol=1e-5, rtol=1e-5)

    # Awkward shape (n not a multiple of 128) -> minimal-pad fallback path.
    x_odd = jax.random.normal(k2, (3, 5, 7, 11), dtype=jnp.float32) * 3.0
    out_odd = disp_act(x_odd)
    jax.block_until_ready(out_odd)
    assert jnp.allclose(out_odd, jnp.clip(jax.nn.softplus(x_odd), 1e-4, 1e4),
                        atol=1e-5, rtol=1e-5)

    # bf16 I/O (dtype-aware tiling; math still f32 in-kernel).
    x_bf = jax.random.normal(k3, (4, 8, 32), dtype=jnp.float32).astype(jnp.bfloat16)
    out_bf = disp_act(x_bf)
    jax.block_until_ready(out_bf)
    ref_bf = jnp.clip(jax.nn.softplus(x_bf.astype(jnp.float32)), 1e-4, 1e4)
    assert out_bf.dtype == jnp.bfloat16
    assert jnp.allclose(out_bf.astype(jnp.float32), ref_bf, atol=2e-2, rtol=2e-2)

    print("KERNEL_OK")
</pallas_src>

<mosaic_0001>
module attributes {stable_mosaic.version = 11 : i64} {
  func.func @_dispact_kernel(%arg0: i32, %arg1: memref<4x512xf32, #tpu.memory_space<vmem>>, %arg2: memref<4x512xf32, #tpu.memory_space<vmem>>) attributes {dimension_semantics = [#tpu.dimension_semantics<parallel>], iteration_bounds = array<i64: 1>, scalar_prefetch = 0 : i64, scratch_operands = 0 : i64, tpu.core_type = #tpu.core_type<tc>, window_params = [{transform_indices = @transform_0, window_bounds = array<i64: 4, 512>}, {transform_indices = @transform_1, window_bounds = array<i64: 4, 512>}]} {
    %c0 = arith.constant 0 : index
    %c0_0 = arith.constant 0 : index
    %0 = vector.load %arg1[%c0, %c0_0] : memref<4x512xf32, #tpu.memory_space<vmem>>, vector<4x512xf32>
    %cst = arith.constant 0.000000e+00 : f32
    %1 = vector.broadcast %cst : f32 to vector<4x512xf32>
    %2 = arith.maximumf %0, %1 : vector<4x512xf32>
    %3 = math.absf %0 : vector<4x512xf32>
    %cst_1 = arith.constant 0.000000e+00 : f32
    %4 = vector.broadcast %cst_1 : f32 to vector<4x512xf32>
    %5 = arith.subf %4, %3 : vector<4x512xf32>
    %6 = math.exp %5 : vector<4x512xf32>
    %7 = math.log1p %6 : vector<4x512xf32>
    %8 = arith.addf %2, %7 : vector<4x512xf32>
    %cst_2 = arith.constant 9.99999974E-5 : f32
    %cst_3 = arith.constant 1.000000e+04 : f32
    %9 = vector.broadcast %cst_2 : f32 to vector<4x512xf32>
    %10 = arith.maximumf %9, %8 : vector<4x512xf32>
    %11 = vector.broadcast %cst_3 : f32 to vector<4x512xf32>
    %12 = arith.minimumf %11, %10 : vector<4x512xf32>
    %c0_4 = arith.constant 0 : index
    %c0_5 = arith.constant 0 : index
    %13 = vector.load %arg2[%c0_4, %c0_5] : memref<4x512xf32, #tpu.memory_space<vmem>>, vector<4x512xf32>
    tpu.vector_store %arg2[%c0_4, %c0_5], %12 {strides = array<i32>} : memref<4x512xf32, #tpu.memory_space<vmem>>, vector<4x512xf32>,
    return
  }
  func.func @transform_0(%arg0: i32) -> (i32, i32) {
    %c0_i32 = arith.constant 0 : i32
    %c0_i32_0 = arith.constant 0 : i32
    return %arg0, %c0_i32 : i32, i32
  }
  func.func @transform_1(%arg0: i32) -> (i32, i32) {
    %c0_i32 = arith.constant 0 : i32
    %c0_i32_0 = arith.constant 0 : i32
    return %arg0, %c0_i32 : i32, i32
  }
}

</mosaic_0001>

<llo_original>
// kernel: tpu_custom_call.1
$region0: #{tpu_custom_call.1}
  #allocation0 [shape = 'u32[]', space=smem, size = 0x4, offset = 0x4, fixed_abs, tag = 'smem constant byte address 0x4 - core index']
  #allocation1 [shape = 'u32[144,128]{1,0:T(1,128)}', space=vmem, size = 0x12000, scoped, tag = 'internal scratch']
  %s0 = inlined_call_operand.hbm [shape: f32[4,512], index: 0, kind: input, shape index: {}]
  %s1 = inlined_call_operand.hbm [shape: f32[4,512], index: 1, kind: output, shape index: {}]
  %s2 = sld [smem:[#allocation0]]
  $region18: #{tpu_custom_call.1} parent=0
    _
  %s4 = ssub.s32 1, %s2
  %s5 = scalar_select 0, %s4, %s2
  $region1: #{tpu_custom_call.1} parent=0
    #allocation2 [shape = 'u8[8192]{0}', space=vmem, size = 0x2000, scoped, tag = 'input window, operand 0, single buffered']
    #allocation3 [shape = 's32[1]{0}', space=sflag, size = 0x4, scoped, tag = 'scoped memory for tpu_custom_call.1']
    #allocation4 [shape = 's32[1]{0}', space=sflag, size = 0x4, scoped, tag = 'scoped memory for tpu_custom_call.1']
    #allocation5 [shape = 'u8[8192]{0}', space=vmem, size = 0x2000, scoped, tag = 'output window, operand 0, single buffered']
    %6 = vsyncpa [#allocation3], 0
    %7 = vsyncpa [#allocation4], 0
    // Predicated region
    $region2: #{tpu_custom_call.1} parent=1 // pred_check
      _
    $region3: #{tpu_custom_call.1} parent=1 // pred_check_branch
      %9 = sbr.rel (0) target = $region5
    $region4: #{tpu_custom_call.1} parent=1 // pred_region
      %s11 = ssub.s32 256, 256
      %12 = vsyncadd [#allocation3], %s11
      %s14 = sshll.u32 [#allocation2], 4
      %s15 = int_to_ptr.vmem [resolvable:$true] %s14
      %17 = dma.hbm_to_vmem [thread:$0]  %s0, 256, %s15, [#allocation3]
    $region5: #{tpu_custom_call.1} parent=1 // pred_fallthru
      _
    // Predicated region
    $region6: #{tpu_custom_call.1} parent=1 // pred_check
      _
    $region7: #{tpu_custom_call.1} parent=1 // pred_check_branch
      %19 = sbr.rel (0) target = $region9
    $region8: #{tpu_custom_call.1} parent=1 // pred_region
      %20 = dma.done [#allocation3], 256
    $region9: #{tpu_custom_call.1} parent=1 // pred_fallthru
      _
    %v21 = vld [vmem:[#allocation2] sm:$0xff]
    %v22 = vld [vmem:[#allocation2 + $0x8] sm:$0xff]
    %v23 = vmax.f32 %v21, 0.0
    %v24 = vmax.f32 %v22, 0.0
    %v25 = vand.u32 2147483647, %v21
    %v26 = vand.u32 2147483647, %v22
    %v27 = vsub.f32 0.0, %v25
    %v28 = vsub.f32 0.0, %v26
    %v29 = vmul.f32 %v27, 1.442695
    %v30 = vpow.pop %v29
    %v31 = vmul.f32 %v28, 1.442695
    %v32 = vpow.pop %v31
    %v33 = vadd.f32 %v30, 1.0
    %v34 = vlog2.pop %v33
    %v35 = vmul.f32 %v34, 0.6931472
    %v36 = vmul.f32 -0.5, %v30
    %v37 = vadd.f32 %v36, 1.0
    %v38 = vmul.f32 %v37, %v30
    %v39 = vand.u32 2147483647, %v30
    %vm40 = vcmp.lt.f32.partialorder %v39, 0.0004427343
    %v41 = vsel %vm40, %v38, %v35
    %v42 = vadd.f32 %v32, 1.0
    %v43 = vlog2.pop %v42
    %v44 = vmul.f32 %v43, 0.6931472
    %v45 = vmul.f32 -0.5, %v32
    %v46 = vadd.f32 %v45, 1.0
    %v47 = vmul.f32 %v46, %v32
    %v48 = vand.u32 2147483647, %v32
    %vm49 = vcmp.lt.f32.partialorder %v48, 0.0004427343
    %v50 = vsel %vm49, %v47, %v44
    %v51 = vadd.f32 %v23, %v41
    %v52 = vadd.f32 %v24, %v50
    %v53 = vmax.f32 %v51, 0.0001
    %v54 = vmax.f32 %v52, 0.0001
    %v55 = vmin.f32 %v53, 10000.0
    %v56 = vmin.f32 %v54, 10000.0
    %57 = vst [vmem:[#allocation5] sm:$0xff] %v55
    %58 = vst [vmem:[#allocation5 + $0x8] sm:$0xff] %v56
    // Predicated region
    $region10: #{tpu_custom_call.1} parent=1 // pred_check
      _
    $region11: #{tpu_custom_call.1} parent=1 // pred_check_branch
      %60 = sbr.rel (0) target = $region13
    $region12: #{tpu_custom_call.1} parent=1 // pred_region
      %s62 = ssub.s32 256, 256
      %63 = vsyncadd [#allocation4], %s62
      %s65 = sshll.u32 [#allocation5], 4
      %s66 = int_to_ptr.vmem [resolvable:$true] %s65
      %68 = dma.vmem_to_hbm [thread:$0]  %s66, 256, %s1, [#allocation4]
    $region13: #{tpu_custom_call.1} parent=1 // pred_fallthru
      _
    // Predicated region
    $region14: #{tpu_custom_call.1} parent=1 // pred_check
      _
    $region15: #{tpu_custom_call.1} parent=1 // pred_check_branch
      %70 = sbr.rel (0) target = $region17
    $region16: #{tpu_custom_call.1} parent=1 // pred_region
      %71 = dma.done [#allocation4], 256
    $region17: #{tpu_custom_call.1} parent=1 // pred_fallthru
      _
    %72 = vsyncpa [#allocation3], 1
    %73 = vsyncpa [#allocation4], 1

</llo_original>
